<compile_context>
chip_gen: v7x
topology: tpu7x:2x2x1
jax: 0.10.0
libtpu: 0.0.40
codegen_flags: <defaults>
</compile_context>

<pallas_src>
import functools

import jax
import jax.numpy as jnp
from jax.experimental import pallas as pl
from jax.experimental.pallas import tpu as pltpu

_EPS = 1e-6
_LANES = 128
_SUBLANES = 8
_MAX_BLOCK_ROWS = 8192   # 4 MiB f32 / 2 MiB bf16 per input per pipeline buffer
_NUM_CORES = 2           # megacore split on v7x; harmless serial loop elsewhere


def _charbonnier_kernel(x_ref, y_ref, o_ref, *, rows, block_rows,
                        chunks_total, chunks_per_core, ragged, full_cover):
    c = pl.program_id(0)   # TensorCore split axis ("parallel")
    i = pl.program_id(1)   # streaming chunk axis ("arbitrary" reduction)

    # o_ref is this core's resident (8, 128) f32 partial-sum accumulator.
    @pl.when(i == 0)
    def _init():
        o_ref[...] = jnp.zeros_like(o_ref)

    chunk = c * chunks_per_core + i        # logical chunk id (scalar)

    def accumulate(mask_rows):
        # Cast in-kernel (inputs stream HBM in their native dtype).
        xv = x_ref[...].astype(jnp.float32)
        yv = y_ref[...].astype(jnp.float32)
        diff = xv - yv
        err = jnp.sqrt(diff * diff + jnp.float32(_EPS))
        if mask_rows:
            # Row-granularity mask: only the ragged last block ever runs this.
            row_ids = jax.lax.broadcasted_iota(
                jnp.int32, (block_rows, _LANES), 0)
            valid = (chunk * block_rows + row_ids) < rows
            err = jnp.where(valid, err, jnp.float32(0.0))
        # Pure-VPU partial sums: add block_rows/8 f32 vregs into the resident
        # accumulator; the cross-lane/sublane reduce happens once, outside.
        o_ref[...] += jnp.sum(err.reshape(-1, _SUBLANES, _LANES), axis=0)

    if ragged:
        # Full-valid chunks take the unmasked fast path; only the last logical
        # chunk masks rows; clamped duplicate chunks (chunk >= chunks_total)
        # are skipped entirely.
        is_last = chunk == chunks_total - 1
        pl.when(chunk < chunks_total - 1)(lambda: accumulate(False))
        pl.when(is_last)(lambda: accumulate(True))
    elif not full_cover:
        # Even split impossible: skip the clamped duplicate chunk(s).
        pl.when(chunk < chunks_total)(lambda: accumulate(False))
    else:
        accumulate(False)


def _charbonnier_partial_sums(x2, y2, rows):
    """Sum of sqrt((x-y)^2 + eps) over a (rows, 128) slab, rows % 8 == 0."""
    block_rows = min(_MAX_BLOCK_ROWS, rows)            # multiple of 8
    chunks_total = (rows + block_rows - 1) // block_rows
    grid_cores = _NUM_CORES if chunks_total >= _NUM_CORES else 1
    chunks_per_core = (chunks_total + grid_cores - 1) // grid_cores
    ragged = (rows % block_rows) != 0
    full_cover = (chunks_per_core * grid_cores) == chunks_total

    def in_index_map(c, i):
        # Clamp so the DMA never addresses an out-of-range block; out-of-range
        # logical chunks are skipped inside the kernel.
        return (jnp.minimum(c * chunks_per_core + i, chunks_total - 1), 0)

    kernel = functools.partial(
        _charbonnier_kernel,
        rows=rows,
        block_rows=block_rows,
        chunks_total=chunks_total,
        chunks_per_core=chunks_per_core,
        ragged=ragged,
        full_cover=full_cover,
    )

    n_elems = rows * _LANES
    cost = pl.CostEstimate(
        flops=5 * n_elems,
        transcendentals=n_elems,
        bytes_accessed=n_elems * (x2.dtype.itemsize + y2.dtype.itemsize)
        + grid_cores * _SUBLANES * _LANES * 4,
    )

    partials = pl.pallas_call(
        kernel,
        out_shape=jax.ShapeDtypeStruct((grid_cores * _SUBLANES, _LANES),
                                       jnp.float32),
        grid_spec=pltpu.PrefetchScalarGridSpec(
            num_scalar_prefetch=0,
            grid=(grid_cores, chunks_per_core),
            in_specs=[
                pl.BlockSpec((block_rows, _LANES), in_index_map),
                pl.BlockSpec((block_rows, _LANES), in_index_map),
            ],
            out_specs=pl.BlockSpec((_SUBLANES, _LANES), lambda c, i: (c, 0)),
        ),
        compiler_params=pltpu.CompilerParams(
            dimension_semantics=("parallel", "arbitrary"),
            vmem_limit_bytes=32 * 1024 * 1024,
        ),
        cost_estimate=cost,
    )(x2, y2)

    return jnp.sum(partials)


def l1_charbonnier_loss(x, y):
    assert x.shape == y.shape, "X and Y must have the same shape"
    if x.dtype != y.dtype:
        common = jnp.promote_types(x.dtype, y.dtype)
        x = x.astype(common)
        y = y.astype(common)

    xf = x.reshape(-1)   # native dtype, no upcast, no pad
    yf = y.reshape(-1)
    n_total = int(xf.size)

    align = _SUBLANES * _LANES                       # 1024 elements
    n_main = (n_total // align) * align              # kernel-covered prefix

    total = jnp.float32(0.0)

    if n_main:
        # Common case (n_total % 1024 == 0): pure metadata reshape, zero copy.
        # Rare misaligned case: XLA may materialise the prefix slice (one
        # pass), still cheaper than the old upcast+pad scheme and with no
        # in-kernel per-element mask.
        xm = xf if n_main == n_total else xf[:n_main]
        ym = yf if n_main == n_total else yf[:n_main]
        rows = n_main // _LANES                      # multiple of 8
        total = total + _charbonnier_partial_sums(
            xm.reshape(rows, _LANES), ym.reshape(rows, _LANES), rows)

    if n_total - n_main:
        # <1024-element ragged tail: trivial plain-jnp reduction.
        xt = xf[n_main:].astype(jnp.float32)
        yt = yf[n_main:].astype(jnp.float32)
        dt = xt - yt
        total = total + jnp.sum(jnp.sqrt(dt * dt + jnp.float32(_EPS)))

    return total / jnp.float32(n_total)


def _reference(x, y):
    diff = x.astype(jnp.float32) - y.astype(jnp.float32)
    return jnp.mean(jnp.sqrt(diff * diff + _EPS))


if __name__ == "__main__":
    key = jax.random.PRNGKey(0)
    kx, ky = jax.random.split(key)

    # NCHW, matching the PyTorch convention for this loss's typical inputs.
    shape = (2, 4, 16, 16)
    x = jax.random.normal(kx, shape, dtype=jnp.float32)
    y = jax.random.normal(ky, shape, dtype=jnp.float32)

    loss = jax.block_until_ready(l1_charbonnier_loss(x, y))
    ref = jax.block_until_ready(_reference(x, y))
    assert jnp.allclose(loss, ref, rtol=1e-5, atol=1e-6), (loss, ref)

    # Native-bf16 + misaligned-size path (kernel prefix + jnp tail).
    shape2 = (2, 3, 5, 61)   # 1830 elements: 1024 in-kernel + 806 tail
    xb = jax.random.normal(kx, shape2, dtype=jnp.float32).astype(jnp.bfloat16)
    yb = jax.random.normal(ky, shape2, dtype=jnp.float32).astype(jnp.bfloat16)
    loss_b = jax.block_until_ready(l1_charbonnier_loss(xb, yb))
    ref_b = jax.block_until_ready(_reference(xb, yb))
    assert jnp.allclose(loss_b, ref_b, rtol=1e-4, atol=1e-6), (loss_b, ref_b)

    print("KERNEL_OK")
</pallas_src>

<mosaic_0001>
module attributes {stable_mosaic.version = 11 : i64} {
  func.func @_charbonnier_kernel(%arg0: i32, %arg1: i32, %arg2: memref<16x128xf32, #tpu.memory_space<vmem>>, %arg3: memref<16x128xf32, #tpu.memory_space<vmem>>, %arg4: memref<8x128xf32, #tpu.memory_space<vmem>>) attributes {dimension_semantics = [#tpu.dimension_semantics<parallel>, #tpu.dimension_semantics<arbitrary>], iteration_bounds = array<i64: 1, 1>, scalar_prefetch = 0 : i64, scratch_operands = 0 : i64, tpu.core_type = #tpu.core_type<tc>, window_params = [{transform_indices = @transform_0, window_bounds = array<i64: 16, 128>}, {transform_indices = @transform_1, window_bounds = array<i64: 16, 128>}, {transform_indices = @transform_2, window_bounds = array<i64: 8, 128>}]} {
    %c0_i32 = arith.constant 0 : i32
    %0 = arith.cmpi eq, %arg1, %c0_i32 : i32
    %1 = arith.extui %0 : i1 to i32
    %c0_i32_0 = arith.constant 0 : i32
    %2 = arith.cmpi ne, %1, %c0_i32_0 : i32
    scf.if %2 {
      %cst_9 = arith.constant 0.000000e+00 : f32
      %15 = vector.broadcast %cst_9 : f32 to vector<8x128xf32>
      %c0_10 = arith.constant 0 : index
      %c0_11 = arith.constant 0 : index
      %16 = vector.load %arg4[%c0_10, %c0_11] : memref<8x128xf32, #tpu.memory_space<vmem>>, vector<8x128xf32>
      tpu.vector_store %arg4[%c0_10, %c0_11], %15 {strides = array<i32>} : memref<8x128xf32, #tpu.memory_space<vmem>>, vector<8x128xf32>,
    } else {
    }
    %c0 = arith.constant 0 : index
    %c0_1 = arith.constant 0 : index
    %3 = vector.load %arg2[%c0, %c0_1] : memref<16x128xf32, #tpu.memory_space<vmem>>, vector<16x128xf32>
    %c0_2 = arith.constant 0 : index
    %c0_3 = arith.constant 0 : index
    %4 = vector.load %arg3[%c0_2, %c0_3] : memref<16x128xf32, #tpu.memory_space<vmem>>, vector<16x128xf32>
    %5 = arith.subf %3, %4 : vector<16x128xf32>
    %6 = arith.mulf %5, %5 : vector<16x128xf32>
    %cst = arith.constant 9.99999997E-7 : f32
    %7 = vector.broadcast %cst : f32 to vector<16x128xf32>
    %8 = arith.addf %6, %7 : vector<16x128xf32>
    %9 = math.sqrt %8 : vector<16x128xf32>
    %c0_4 = arith.constant 0 : index
    %c0_5 = arith.constant 0 : index
    %10 = vector.load %arg4[%c0_4, %c0_5] : memref<8x128xf32, #tpu.memory_space<vmem>>, vector<8x128xf32>
    %11 = vector.shape_cast %9 : vector<16x128xf32> to vector<2x8x128xf32>
    %cst_6 = arith.constant dense<0.000000e+00> : vector<8x128xf32>
    %12 = vector.multi_reduction <add>, %11, %cst_6 [0] : vector<2x8x128xf32> to vector<8x128xf32>
    %13 = arith.addf %10, %12 : vector<8x128xf32>
    %c0_7 = arith.constant 0 : index
    %c0_8 = arith.constant 0 : index
    %14 = vector.load %arg4[%c0_7, %c0_8] : memref<8x128xf32, #tpu.memory_space<vmem>>, vector<8x128xf32>
    tpu.vector_store %arg4[%c0_7, %c0_8], %13 {strides = array<i32>} : memref<8x128xf32, #tpu.memory_space<vmem>>, vector<8x128xf32>,
    return
  }
  func.func @transform_0(%arg0: i32, %arg1: i32) -> (i32, i32) {
    %c1_i32 = arith.constant 1 : i32
    %0 = arith.muli %arg0, %c1_i32 : i32
    %1 = arith.addi %0, %arg1 : i32
    %c0_i32 = arith.constant 0 : i32
    %2 = arith.minsi %1, %c0_i32 : i32
    %c0_i32_0 = arith.constant 0 : i32
    %c0_i32_1 = arith.constant 0 : i32
    return %2, %c0_i32_0 : i32, i32
  }
  func.func @transform_1(%arg0: i32, %arg1: i32) -> (i32, i32) {
    %c1_i32 = arith.constant 1 : i32
    %0 = arith.muli %arg0, %c1_i32 : i32
    %1 = arith.addi %0, %arg1 : i32
    %c0_i32 = arith.constant 0 : i32
    %2 = arith.minsi %1, %c0_i32 : i32
    %c0_i32_0 = arith.constant 0 : i32
    %c0_i32_1 = arith.constant 0 : i32
    return %2, %c0_i32_0 : i32, i32
  }
  func.func @transform_2(%arg0: i32, %arg1: i32) -> (i32, i32) {
    %c0_i32 = arith.constant 0 : i32
    %c0_i32_0 = arith.constant 0 : i32
    return %arg0, %c0_i32 : i32, i32
  }
}

</mosaic_0001>

<llo_original>
// kernel: tpu_custom_call.1
$region0: #{tpu_custom_call.1}
  #allocation0 [shape = 'u32[]', space=smem, size = 0x4, offset = 0x4, fixed_abs, tag = 'smem constant byte address 0x4 - core index']
  #allocation1 [shape = 'u32[144,128]{1,0:T(1,128)}', space=vmem, size = 0x12000, scoped, tag = 'internal scratch']
  %s0 = inlined_call_operand.hbm [shape: f32[16,128], index: 0, kind: input, shape index: {}]
  %s1 = inlined_call_operand.hbm [shape: f32[16,128], index: 1, kind: input, shape index: {}]
  %s2 = inlined_call_operand.hbm [shape: f32[8,128], index: 2, kind: output, shape index: {}]
  %s3 = sld [smem:[#allocation0]]
  $region30: #{tpu_custom_call.1} parent=0
    _
  %s5 = ssub.s32 1, %s3
  %s6 = scalar_select 0, %s5, %s3
  $region1: #{tpu_custom_call.1} parent=0
    #allocation2 [shape = 'u8[8192]{0}', space=vmem, size = 0x2000, scoped, tag = 'input window, operand 0, single buffered']
    #allocation3 [shape = 's32[1]{0}', space=sflag, size = 0x4, scoped, tag = 'scoped memory for tpu_custom_call.1']
    #allocation4 [shape = 's32[1]{0}', space=sflag, size = 0x4, scoped, tag = 'scoped memory for tpu_custom_call.1']
    #allocation5 [shape = 'u8[8192]{0}', space=vmem, size = 0x2000, scoped, tag = 'input window, operand 1, single buffered']
    #allocation6 [shape = 's32[1]{0}', space=sflag, size = 0x4, scoped, tag = 'scoped memory for tpu_custom_call.1']
    #allocation7 [shape = 'u8[4096]{0}', space=vmem, size = 0x1000, scoped, tag = 'output window, operand 0, single buffered']
    %7 = vsyncpa [#allocation3], 0
    %8 = vsyncpa [#allocation6], 0
    %9 = vsyncpa [#allocation4], 0
    // Predicated region
    $region2: #{tpu_custom_call.1} parent=1 // pred_check
      _
    $region3: #{tpu_custom_call.1} parent=1 // pred_check_branch
      %11 = sbr.rel (0) target = $region5
    $region4: #{tpu_custom_call.1} parent=1 // pred_region
      %s12 = sadd.s32 0, 0
      %p13 = scmp.lt.s32.totalorder %s12, 0
      %s14 = scalar_select %p13, %s12, 0
      %s15 = smul.u32 2, %s14
      %s17 = ssub.s32 256, 256
      %18 = vsyncadd [#allocation3], %s17
      %s19 = smul.addr %s15, 128
      %s20 = scalar_lea.hbm %s0, %s19
      %s21 = sshll.u32 [#allocation2], 4
      %s22 = int_to_ptr.vmem [resolvable:$true] %s21
      %27 = dma.hbm_to_vmem [thread:$0]  %s20, 256, %s22, [#allocation3], 128, 128, 8
    $region5: #{tpu_custom_call.1} parent=1 // pred_fallthru
      _
    // Predicated region
    $region6: #{tpu_custom_call.1} parent=1 // pred_check
      _
    $region7: #{tpu_custom_call.1} parent=1 // pred_check_branch
      %29 = sbr.rel (0) target = $region9
    $region8: #{tpu_custom_call.1} parent=1 // pred_region
      %s30 = sadd.s32 0, 0
      %p31 = scmp.lt.s32.totalorder %s30, 0
      %s32 = scalar_select %p31, %s30, 0
      %s33 = smul.u32 2, %s32
      %s35 = ssub.s32 256, 256
      %36 = vsyncadd [#allocation6], %s35
      %s37 = smul.addr %s33, 128
      %s38 = scalar_lea.hbm %s1, %s37
      %s39 = sshll.u32 [#allocation5], 4
      %s40 = int_to_ptr.vmem [resolvable:$true] %s39
      %45 = dma.hbm_to_vmem [thread:$0]  %s38, 256, %s40, [#allocation6], 128, 128, 8
    $region9: #{tpu_custom_call.1} parent=1 // pred_fallthru
      _
    // Predicated region
    $region10: #{tpu_custom_call.1} parent=1 // pred_check
      _
    $region11: #{tpu_custom_call.1} parent=1 // pred_check_branch
      %47 = sbr.rel (0) target = $region13
    $region12: #{tpu_custom_call.1} parent=1 // pred_region
      %48 = dma.done [#allocation3], 256
    $region13: #{tpu_custom_call.1} parent=1 // pred_fallthru
      _
    // Predicated region
    $region14: #{tpu_custom_call.1} parent=1 // pred_check
      _
    $region15: #{tpu_custom_call.1} parent=1 // pred_check_branch
      %50 = sbr.rel (0) target = $region17
    $region16: #{tpu_custom_call.1} parent=1 // pred_region
      %51 = dma.done [#allocation6], 256
    $region17: #{tpu_custom_call.1} parent=1 // pred_fallthru
      _
    %s52 = sadd.s32 0, 0
    %p53 = scmp.lt.s32.totalorder %s52, 0
    %s54 = scalar_select %p53, %s52, 0
    %s55 = smul.u32 2, %s54
    %s56 = sadd.s32 0, 0
    %p57 = scmp.lt.s32.totalorder %s56, 0
    %s58 = scalar_select %p57, %s56, 0
    %s59 = smul.u32 2, %s58
    %p60 = scmp.eq.s32.totalorder 0, 0
    // Predicated region
    $region18: #{tpu_custom_call.1} parent=1 // pred_check
      %p61 = pneg %p60
    $region19: #{tpu_custom_call.1} parent=1 // pred_check_branch
      %63 = sbr.rel (%p61) target = $region21
    $region20: #{tpu_custom_call.1} parent=1 // pred_region
      %64 = vst [vmem:[#allocation7] sm:$0xff] 0.0
    $region21: #{tpu_custom_call.1} parent=1 // pred_fallthru
      _
    %v65 = vld [vmem:[#allocation2] sm:$0xff]
    %v66 = vld [vmem:[#allocation2 + $0x8] sm:$0xff]
    %v67 = vld [vmem:[#allocation5] sm:$0xff]
    %v68 = vld [vmem:[#allocation5 + $0x8] sm:$0xff]
    %v69 = vsub.f32 %v65, %v67
    %v70 = vsub.f32 %v66, %v68
    %v71 = vmul.f32 %v69, %v69
    %v72 = vmul.f32 %v70, %v70
    %v73 = vadd.f32 %v71, 1e-06
    %v74 = vadd.f32 %v72, 1e-06
    %v75 = vrsqrt.pop %v73
    %v76 = vmul.f32 %v73, %v75
    %vm77 = vcmp.eq.f32.partialorder %v73, inf
    %v78 = vsel %vm77, %v73, %v76
    %vm79 = vcmp.eq.f32.partialorder %v73, 0.0
    %v80 = vand.u32 %v73, 2147483648
    %v81 = vsel %vm79, %v80, %v78
    %v82 = vrsqrt.pop %v74
    %v83 = vmul.f32 %v74, %v82
    %vm84 = vcmp.eq.f32.partialorder %v74, inf
    %v85 = vsel %vm84, %v74, %v83
    %vm86 = vcmp.eq.f32.partialorder %v74, 0.0
    %v87 = vand.u32 %v74, 2147483648
    %v88 = vsel %vm86, %v87, %v85
    %v89 = vld [vmem:[#allocation7] sm:$0xff]
    %v90 = vadd.f32 %v81, %v88
    %v91 = vadd.f32 %v89, %v90
    %92 = vst [vmem:[#allocation7] sm:$0xff] %v91
    // Predicated region
    $region22: #{tpu_custom_call.1} parent=1 // pred_check
      _
    $region23: #{tpu_custom_call.1} parent=1 // pred_check_branch
      %94 = sbr.rel (0) target = $region25
    $region24: #{tpu_custom_call.1} parent=1 // pred_region
      %s96 = ssub.s32 128, 128
      %97 = vsyncadd [#allocation4], %s96
      %s99 = sshll.u32 [#allocation7], 4
      %s100 = int_to_ptr.vmem [resolvable:$true] %s99
      %102 = dma.vmem_to_hbm [thread:$0]  %s100, 128, %s2, [#allocation4]
    $region25: #{tpu_custom_call.1} parent=1 // pred_fallthru
      _
    // Predicated region
    $region26: #{tpu_custom_call.1} parent=1 // pred_check
      _
    $region27: #{tpu_custom_call.1} parent=1 // pred_check_branch
      %104 = sbr.rel (0) target = $region29
    $region28: #{tpu_custom_call.1} parent=1 // pred_region
      %105 = dma.done [#allocation4], 128
    $region29: #{tpu_custom_call.1} parent=1 // pred_fallthru
      _
    %106 = vsyncpa [#allocation3], 1
    %107 = vsyncpa [#allocation6], 1
    %108 = vsyncpa [#allocation4], 1

</llo_original>
